<compile_context>
chip_gen: v7x
topology: tpu7x:2x2x1
jax: 0.10.0
libtpu: 0.0.40
codegen_flags: <defaults>
</compile_context>

<pallas_src>
import functools

import jax
import jax.numpy as jnp
from jax.experimental import pallas as pl
from jax.experimental.pallas import tpu as pltpu


# ----------------------------- Pallas kernel -------------------------------

def _kg_loss_kernel(h_ref, r_ref, pos_ref, neg_ref,
                    rvw_ref, hvw_ref, bias_ref, wtop_ref, wbot_ref,
                    out_ref, acc_ref, *,
                    batch_size, block_rows, inner_tiles, l2_lambda, need_mask):
    c = pl.program_id(0)          # parallel slice (TensorCore on v7x)
    i = pl.program_id(1)          # reduction step within the slice

    @pl.when(i == 0)
    def _init():
        acc_ref[...] = jnp.zeros_like(acc_ref)

    f32 = jnp.float32
    # Streamed (possibly bf16) inputs; elementwise math stays in f32.
    h = h_ref[...].astype(f32)          # (TB, D)
    r = r_ref[...].astype(f32)          # (TB, D)
    pt = pos_ref[...].astype(f32)       # (TB, D)
    nt = neg_ref[...].astype(f32)       # (TB, D)

    bias = bias_ref[...]                # (2, D): row 0 = h_bias_b, row 1 = r_bias_b
    hb = bias[0:1, :]
    rb = bias[1:2, :]

    # ---- calc_iar via the rank-1 outer-product identity ----
    # rvw columns: [h_trans_w1, h_trans_w2]   -> rdots = [r.hw1, r.hw2]
    # hvw columns: [r_trans_w2, r_trans_w1]   -> hdots = [h.rw2, h.rw1]
    rdots = jnp.dot(r, rvw_ref[...], preferred_element_type=f32)   # (TB, 2)
    hdots = jnp.dot(h, hvw_ref[...], preferred_element_type=f32)   # (TB, 2)

    cross_h = h * rdots[:, 0:1] + r * hdots[:, 0:1] + hb           # (TB, D)
    cross_r = h * rdots[:, 1:2] + r * hdots[:, 1:2] + rb           # (TB, D)

    # ---- pred_t = cat([cross_h, cross_r], 1) @ sem_trans_w (concat-free) ----
    w_dtype = wtop_ref.dtype  # bf16 MXU operands when streaming bf16
    pred_t = (jnp.dot(cross_h.astype(w_dtype), wtop_ref[...],
                      preferred_element_type=f32)
              + jnp.dot(cross_r.astype(w_dtype), wbot_ref[...],
                        preferred_element_type=f32))               # (TB, D) f32

    # ---- BPR log-sigmoid loss, fused pos/neg reduction ----
    x = jnp.sum(pred_t * (pt - nt), axis=1, keepdims=True)         # (TB, 1)
    # -logsigmoid(x) == softplus(-x), numerically stable form:
    neg_logsig = jnp.maximum(-x, 0.0) + jnp.log1p(jnp.exp(-jnp.abs(x)))

    # ---- L2 regularizer rows: (|cross_h|^2 + |cross_r|^2 + |pos|^2 + |neg|^2)/2
    sq = cross_h * cross_h + cross_r * cross_r + pt * pt + nt * nt
    l2_rows = 0.5 * jnp.sum(sq, axis=1, keepdims=True)             # (TB, 1)

    per_row = neg_logsig + l2_lambda * l2_rows                     # (TB, 1)

    if need_mask:  # static: only emitted when grid coverage != batch
        tile_idx = c * inner_tiles + i                             # unclamped
        row_ids = (tile_idx * block_rows
                   + jax.lax.broadcasted_iota(jnp.int32, (block_rows, 1), 0))
        per_row = jnp.where(row_ids < batch_size, per_row, 0.0)

    # broadcast the (1,1) partial sum across the lane-shaped accumulator
    acc_ref[...] = acc_ref[...] + jnp.sum(per_row, keepdims=True)

    @pl.when(i == inner_tiles - 1)
    def _finalize():
        out_ref[...] = acc_ref[...]        # (1, 128) lane-dense partial


# ------------------------------ wrapper -------------------------------------

def _vmem_capacity_bytes(default=64 << 20):
    try:
        return int(pltpu.get_tpu_info().vmem_capacity_bytes)
    except Exception:
        return default


def _pick_batch_tile(batch, dim, itemsize, resident_bytes, vmem_capacity,
                     max_rows=8192):
    """Largest batch tile whose double-buffered streamed inputs fit the budget."""
    budget = int(0.5 * vmem_capacity) - int(resident_bytes)
    budget = max(budget, 4 << 20)
    rows = budget // (4 * 2 * dim * itemsize)   # 4 inputs x 2 pipeline buffers
    rows = max(8, min(max_rows, (rows // 8) * 8))
    b_pad8 = ((batch + 7) // 8) * 8
    return max(8, min(rows, b_pad8))


def kg_loss_pallas(h_embed, r_embed, pos_t_embed, neg_t_embed, params,
                   l2_lambda, *, block_rows=None, num_parallel=2,
                   use_bf16=True):
    """calc_kg_loss compute (post embedding gather) in one Pallas kernel."""
    B, D = h_embed.shape
    if r_embed.shape != (B, D):
        raise ValueError(
            "calc_iar requires relation_dim == embed_dim; got "
            f"h_embed {h_embed.shape} vs r_embed {r_embed.shape}")
    W = params["sem_trans_w"]
    assert W.shape == (2 * D, D), W.shape

    stream_dtype = jnp.bfloat16 if use_bf16 else jnp.float32
    w_dtype = stream_dtype
    s_item = jnp.dtype(stream_dtype).itemsize
    w_item = jnp.dtype(w_dtype).itemsize

    # --- pack the six (1, D) parameter vectors into three constant inputs ---
    rvec_w = jnp.concatenate(
        [params["h_trans_w1"], params["h_trans_w2"]], axis=0).T.astype(jnp.float32)  # (D, 2)
    hvec_w = jnp.concatenate(
        [params["r_trans_w2"], params["r_trans_w1"]], axis=0).T.astype(jnp.float32)  # (D, 2)
    biases = jnp.concatenate(
        [params["h_bias_b"], params["r_bias_b"]], axis=0).astype(jnp.float32)        # (2, D)
    w_top = W[:D].astype(w_dtype)                                                    # (D, D)
    w_bot = W[D:].astype(w_dtype)                                                    # (D, D)

    # --- stream the four batch embeddings in the (possibly bf16) stream dtype
    h_s = h_embed.astype(stream_dtype)
    r_s = r_embed.astype(stream_dtype)
    pos_s = pos_t_embed.astype(stream_dtype)
    neg_s = neg_t_embed.astype(stream_dtype)

    # --- resident constants footprint (budgeted at worst-case double buffer) ---
    const_bytes_1buf = (2 * (D * 2) + 2 * D) * 4 + 2 * D * D * w_item
    vmem_cap = _vmem_capacity_bytes()

    if block_rows is None:
        block_rows = _pick_batch_tile(B, D, s_item, 2 * const_bytes_1buf, vmem_cap)
    block_rows = max(8, (int(block_rows) // 8) * 8)

    num_tiles = -(-B // block_rows)
    num_parallel = max(1, min(int(num_parallel), num_tiles))
    inner_tiles = -(-num_tiles // num_parallel)
    covered = num_parallel * inner_tiles * block_rows
    need_mask = covered != B

    # --- constant BlockSpecs: single-buffered when pipeline_mode is available ---
    const_shapes = [(D, 2), (D, 2), (2, D), (D, D), (D, D)]
    const_specs = []
    single_buffered = hasattr(pl, "Buffered")
    for shp in const_shapes:
        idx = lambda c, i: (0, 0)
        spec = None
        if single_buffered:
            try:
                spec = pl.BlockSpec(shp, idx, pipeline_mode=pl.Buffered(1))
            except TypeError:
                single_buffered = False
        if spec is None:
            spec = pl.BlockSpec(shp, idx)
        const_specs.append(spec)
    const_buf = 1 if single_buffered else 2

    # --- batch BlockSpec: clamp the block index, mask handles the excess rows ---
    def batch_index(c, i):
        t = c * inner_tiles + i
        return (jnp.minimum(t, num_tiles - 1), 0)

    batch_spec = pl.BlockSpec((block_rows, D), batch_index)

    # --- explicit VMEM limit with headroom (never the full per-core VMEM) ---
    stream_bytes = 4 * 2 * block_rows * D * s_item
    const_bytes = const_buf * const_bytes_1buf
    out_bytes = 2 * num_parallel * 128 * 4
    vmem_limit = int(1.35 * (stream_bytes + const_bytes + out_bytes)) + (4 << 20)
    vmem_limit = max(16 << 20, min(vmem_limit, int(0.85 * vmem_cap)))

    kernel = functools.partial(
        _kg_loss_kernel,
        batch_size=int(B),
        block_rows=int(block_rows),
        inner_tiles=int(inner_tiles),
        l2_lambda=float(l2_lambda),
        need_mask=bool(need_mask),
    )

    out = pl.pallas_call(
        kernel,
        out_shape=jax.ShapeDtypeStruct((1, 128 * num_parallel), jnp.float32),
        grid=(num_parallel, inner_tiles),
        in_specs=[
            batch_spec,        # h
            batch_spec,        # r
            batch_spec,        # pos_t
            batch_spec,        # neg_t
            const_specs[0],    # rvec_w
            const_specs[1],    # hvec_w
            const_specs[2],    # biases
            const_specs[3],    # W_top
            const_specs[4],    # W_bot
        ],
        out_specs=pl.BlockSpec((1, 128), lambda c, i: (0, c)),
        scratch_shapes=[pltpu.VMEM((1, 128), jnp.float32)],
        compiler_params=pltpu.CompilerParams(
            dimension_semantics=("parallel", "arbitrary"),
            vmem_limit_bytes=vmem_limit,
        ),
    )(h_s, r_s, pos_s, neg_s, rvec_w, hvec_w, biases, w_top, w_bot)

    partials = out.reshape(num_parallel, 128)[:, 0]   # one partial sum per slice
    return jnp.sum(partials) / B


# ------------------------------ reference ----------------------------------

def kg_loss_ref(h_embed, r_embed, pos_t_embed, neg_t_embed, params, l2_lambda):
    w1 = params["h_trans_w1"][0]
    w2 = params["h_trans_w2"][0]
    rw1 = params["r_trans_w1"][0]
    rw2 = params["r_trans_w2"][0]
    hb = params["h_bias_b"][0]
    rbias = params["r_bias_b"][0]
    W = params["sem_trans_w"]

    sem = h_embed[:, :, None] * r_embed[:, None, :]                 # (B, D, D)
    cross_h = (jnp.einsum("bij,j->bi", sem, w1)
               + jnp.einsum("bji,j->bi", sem, rw2) + hb)
    cross_r = (jnp.einsum("bij,j->bi", sem, w2)
               + jnp.einsum("bji,j->bi", sem, rw1) + rbias)
    pred_t = jnp.concatenate([cross_h, cross_r], axis=1) @ W
    pos = jnp.sum(pred_t * pos_t_embed, axis=1)
    neg = jnp.sum(pred_t * neg_t_embed, axis=1)
    kg_loss = jnp.mean(-jax.nn.log_sigmoid(pos - neg))

    def l2m(a):
        return jnp.mean(jnp.sum(a * a, axis=1) / 2.0)

    l2 = l2m(cross_h) + l2m(cross_r) + l2m(pos_t_embed) + l2m(neg_t_embed)
    return kg_loss + l2_lambda * l2


# --------------------------- parameter setup --------------------------------

def xavier_uniform(key, shape):
    fan_in, fan_out = shape[0], shape[1]
    limit = (6.0 / (fan_in + fan_out)) ** 0.5
    return jax.random.uniform(key, shape, jnp.float32, -limit, limit)


def init_iar_params(key, n_users, n_entities, n_relations, embed_dim):
    k1, k2, k3 = jax.random.split(key, 3)
    return {
        # nn.Embedding tables, xavier_uniform_ as in __init__
        "entity_user_embed": xavier_uniform(k1, (n_entities + n_users, embed_dim)),
        "relation_embed": xavier_uniform(k2, (n_relations, embed_dim)),
        "sem_trans_w": xavier_uniform(k3, (2 * embed_dim, embed_dim)),
        # module init: constants (kept 2-D (1, D) for TPU lane layout)
        "h_trans_w1": jnp.ones((1, embed_dim), jnp.float32),
        "h_trans_w2": jnp.ones((1, embed_dim), jnp.float32),
        "r_trans_w1": jnp.ones((1, embed_dim), jnp.float32),
        "r_trans_w2": jnp.ones((1, embed_dim), jnp.float32),
        "h_bias_b": jnp.zeros((1, embed_dim), jnp.float32),
        "r_bias_b": jnp.zeros((1, embed_dim), jnp.float32),
    }


# --------------------------------- main -------------------------------------

if __name__ == "__main__":
    n_users, n_entities, n_relations = 10, 20, 5
    embed_dim = 32            # relation_dim must equal embed_dim for calc_iar
    kg_batch = 10             # not a multiple of 8 -> exercises the row mask
    kg_l2loss_lambda = 1e-5

    key = jax.random.PRNGKey(0)
    pkey, hkey, rkey, pkey2, nkey = jax.random.split(key, 5)
    params = init_iar_params(pkey, n_users, n_entities, n_relations, embed_dim)

    # The module initializes the six vectors to 1s/0s, which would hide any
    # term-ordering bug.  Randomize them for a meaningful correctness check.
    for name, k in zip(["h_trans_w1", "h_trans_w2", "r_trans_w1",
                        "r_trans_w2", "h_bias_b", "r_bias_b"],
                       jax.random.split(jax.random.PRNGKey(1), 6)):
        params[name] = jax.random.normal(k, (1, embed_dim), jnp.float32) * 0.1

    # forward(h, r, pos_t, neg_t, mode='train_kg')
    h = jax.random.randint(hkey, (kg_batch,), 0, n_entities + n_users)
    r = jax.random.randint(rkey, (kg_batch,), 0, n_relations)
    pos_t = jax.random.randint(pkey2, (kg_batch,), 0, n_entities + n_users)
    neg_t = jax.random.randint(nkey, (kg_batch,), 0, n_entities + n_users)

    # embedding gathers = glue JAX
    h_embed = jnp.take(params["entity_user_embed"], h, axis=0)
    r_embed = jnp.take(params["relation_embed"], r, axis=0)
    pos_t_embed = jnp.take(params["entity_user_embed"], pos_t, axis=0)
    neg_t_embed = jnp.take(params["entity_user_embed"], neg_t, axis=0)

    ref = kg_loss_ref(h_embed, r_embed, pos_t_embed, neg_t_embed,
                      params, kg_l2loss_lambda)

    # 1) f32 path, auto tile -> tight check against the reference
    loss_f32 = kg_loss_pallas(h_embed, r_embed, pos_t_embed, neg_t_embed,
                              params, kg_l2loss_lambda, use_bf16=False)
    jax.block_until_ready(loss_f32)
    assert jnp.allclose(loss_f32, ref, atol=1e-4, rtol=1e-4), (loss_f32, ref)

    # 2) bf16-streaming path (default), auto tile -> loose check
    loss_bf16 = kg_loss_pallas(h_embed, r_embed, pos_t_embed, neg_t_embed,
                               params, kg_l2loss_lambda)
    jax.block_until_ready(loss_bf16)
    assert jnp.allclose(loss_bf16, ref, atol=5e-2, rtol=5e-2), (loss_bf16, ref)

    # 3) forced small tiles + 2 parallel slices: exercises the unpadded partial
    #    tile mask, cross-tile accumulation, and per-slice output partials.
    loss_small = kg_loss_pallas(h_embed, r_embed, pos_t_embed, neg_t_embed,
                                params, kg_l2loss_lambda,
                                block_rows=8, num_parallel=2)
    jax.block_until_ready(loss_small)
    assert jnp.allclose(loss_small, ref, atol=5e-2, rtol=5e-2), (loss_small, ref)

    print("KERNEL_OK")
</pallas_src>

<mosaic_0001>
module attributes {stable_mosaic.version = 11 : i64} {
  func.func @_kg_loss_kernel(%arg0: i32, %arg1: i32, %arg2: memref<16x32xf32, #tpu.memory_space<vmem>>, %arg3: memref<16x32xf32, #tpu.memory_space<vmem>>, %arg4: memref<16x32xf32, #tpu.memory_space<vmem>>, %arg5: memref<16x32xf32, #tpu.memory_space<vmem>>, %arg6: memref<32x2xf32, #tpu.memory_space<vmem>>, %arg7: memref<32x2xf32, #tpu.memory_space<vmem>>, %arg8: memref<2x32xf32, #tpu.memory_space<vmem>>, %arg9: memref<32x32xf32, #tpu.memory_space<vmem>>, %arg10: memref<32x32xf32, #tpu.memory_space<vmem>>, %arg11: memref<1x128xf32, #tpu.memory_space<vmem>>, %arg12: memref<1x128xf32, #tpu.memory_space<vmem>>) attributes {dimension_semantics = [#tpu.dimension_semantics<parallel>, #tpu.dimension_semantics<arbitrary>], iteration_bounds = array<i64: 1, 1>, scalar_prefetch = 0 : i64, scratch_operands = 1 : i64, tpu.core_type = #tpu.core_type<tc>, window_params = [{transform_indices = @transform_0, window_bounds = array<i64: 16, 32>}, {transform_indices = @transform_1, window_bounds = array<i64: 16, 32>}, {transform_indices = @transform_2, window_bounds = array<i64: 16, 32>}, {transform_indices = @transform_3, window_bounds = array<i64: 16, 32>}, {pipeline_mode = #tpu.pipeline_mode<synchronous>, transform_indices = @transform_4, window_bounds = array<i64: 32, 2>}, {pipeline_mode = #tpu.pipeline_mode<synchronous>, transform_indices = @transform_5, window_bounds = array<i64: 32, 2>}, {pipeline_mode = #tpu.pipeline_mode<synchronous>, transform_indices = @transform_6, window_bounds = array<i64: 2, 32>}, {pipeline_mode = #tpu.pipeline_mode<synchronous>, transform_indices = @transform_7, window_bounds = array<i64: 32, 32>}, {pipeline_mode = #tpu.pipeline_mode<synchronous>, transform_indices = @transform_8, window_bounds = array<i64: 32, 32>}, {transform_indices = @transform_9, window_bounds = array<i64: 1, 128>}]} {
    %c0_i32 = arith.constant 0 : i32
    %0 = arith.cmpi eq, %arg1, %c0_i32 : i32
    %1 = arith.extui %0 : i1 to i32
    %c0_i32_0 = arith.constant 0 : i32
    %2 = arith.cmpi ne, %1, %c0_i32_0 : i32
    scf.if %2 {
      %cst_36 = arith.constant 0.000000e+00 : f32
      %87 = vector.broadcast %cst_36 : f32 to vector<1x128xf32>
      %c0_37 = arith.constant 0 : index
      %c0_38 = arith.constant 0 : index
      %88 = vector.load %arg12[%c0_37, %c0_38] : memref<1x128xf32, #tpu.memory_space<vmem>>, vector<1x128xf32>
      tpu.vector_store %arg12[%c0_37, %c0_38], %87 {strides = array<i32>} : memref<1x128xf32, #tpu.memory_space<vmem>>, vector<1x128xf32>,
    } else {
    }
    %c0 = arith.constant 0 : index
    %c0_1 = arith.constant 0 : index
    %3 = vector.load %arg2[%c0, %c0_1] : memref<16x32xf32, #tpu.memory_space<vmem>>, vector<16x32xf32>
    %c0_2 = arith.constant 0 : index
    %c0_3 = arith.constant 0 : index
    %4 = vector.load %arg3[%c0_2, %c0_3] : memref<16x32xf32, #tpu.memory_space<vmem>>, vector<16x32xf32>
    %c0_4 = arith.constant 0 : index
    %c0_5 = arith.constant 0 : index
    %5 = vector.load %arg4[%c0_4, %c0_5] : memref<16x32xf32, #tpu.memory_space<vmem>>, vector<16x32xf32>
    %c0_6 = arith.constant 0 : index
    %c0_7 = arith.constant 0 : index
    %6 = vector.load %arg5[%c0_6, %c0_7] : memref<16x32xf32, #tpu.memory_space<vmem>>, vector<16x32xf32>
    %c0_8 = arith.constant 0 : index
    %c0_9 = arith.constant 0 : index
    %7 = vector.load %arg8[%c0_8, %c0_9] : memref<2x32xf32, #tpu.memory_space<vmem>>, vector<2x32xf32>
    %8 = vector.extract_strided_slice %7 {offsets = [0, 0], sizes = [1, 32], strides = [1, 1]} : vector<2x32xf32> to vector<1x32xf32>
    %9 = vector.extract_strided_slice %7 {offsets = [1, 0], sizes = [1, 32], strides = [1, 1]} : vector<2x32xf32> to vector<1x32xf32>
    %c0_10 = arith.constant 0 : index
    %c0_11 = arith.constant 0 : index
    %10 = vector.load %arg6[%c0_10, %c0_11] : memref<32x2xf32, #tpu.memory_space<vmem>>, vector<32x2xf32>
    %cst = arith.constant dense<0.000000e+00> : vector<16x2xf32>
    %11 = tpu.matmul %4, %10, %cst {dimension_numbers = #tpu.dot_dimension_numbers<[1], [0], [0], [1], [0, 0, 1, 1], [], []>} : vector<16x32xf32>, vector<32x2xf32>, vector<16x2xf32> -> vector<16x2xf32>
    %c0_12 = arith.constant 0 : index
    %c0_13 = arith.constant 0 : index
    %12 = vector.load %arg7[%c0_12, %c0_13] : memref<32x2xf32, #tpu.memory_space<vmem>>, vector<32x2xf32>
    %cst_14 = arith.constant dense<0.000000e+00> : vector<16x2xf32>
    %13 = tpu.matmul %3, %12, %cst_14 {dimension_numbers = #tpu.dot_dimension_numbers<[1], [0], [0], [1], [0, 0, 1, 1], [], []>} : vector<16x32xf32>, vector<32x2xf32>, vector<16x2xf32> -> vector<16x2xf32>
    %14 = vector.extract_strided_slice %11 {offsets = [0, 0], sizes = [16, 1], strides = [1, 1]} : vector<16x2xf32> to vector<16x1xf32>
    %15 = vector.broadcast %14 : vector<16x1xf32> to vector<16x32xf32>
    %16 = arith.mulf %3, %15 : vector<16x32xf32>
    %17 = vector.extract_strided_slice %13 {offsets = [0, 0], sizes = [16, 1], strides = [1, 1]} : vector<16x2xf32> to vector<16x1xf32>
    %18 = vector.broadcast %17 : vector<16x1xf32> to vector<16x32xf32>
    %19 = arith.mulf %4, %18 : vector<16x32xf32>
    %20 = arith.addf %16, %19 : vector<16x32xf32>
    %21 = vector.broadcast %8 : vector<1x32xf32> to vector<16x32xf32>
    %22 = arith.addf %20, %21 : vector<16x32xf32>
    %23 = vector.extract_strided_slice %11 {offsets = [0, 1], sizes = [16, 1], strides = [1, 1]} : vector<16x2xf32> to vector<16x1xf32>
    %24 = vector.broadcast %23 : vector<16x1xf32> to vector<16x32xf32>
    %25 = arith.mulf %3, %24 : vector<16x32xf32>
    %26 = vector.extract_strided_slice %13 {offsets = [0, 1], sizes = [16, 1], strides = [1, 1]} : vector<16x2xf32> to vector<16x1xf32>
    %27 = vector.broadcast %26 : vector<16x1xf32> to vector<16x32xf32>
    %28 = arith.mulf %4, %27 : vector<16x32xf32>
    %29 = arith.addf %25, %28 : vector<16x32xf32>
    %30 = vector.broadcast %9 : vector<1x32xf32> to vector<16x32xf32>
    %31 = arith.addf %29, %30 : vector<16x32xf32>
    %c0_15 = arith.constant 0 : index
    %c0_16 = arith.constant 0 : index
    %32 = vector.load %arg9[%c0_15, %c0_16] : memref<32x32xf32, #tpu.memory_space<vmem>>, vector<32x32xf32>
    %cst_17 = arith.constant dense<0.000000e+00> : vector<16x32xf32>
    %33 = tpu.matmul %22, %32, %cst_17 {dimension_numbers = #tpu.dot_dimension_numbers<[1], [0], [0], [1], [0, 0, 1, 1], [], []>} : vector<16x32xf32>, vector<32x32xf32>, vector<16x32xf32> -> vector<16x32xf32>
    %c0_18 = arith.constant 0 : index
    %c0_19 = arith.constant 0 : index
    %34 = vector.load %arg10[%c0_18, %c0_19] : memref<32x32xf32, #tpu.memory_space<vmem>>, vector<32x32xf32>
    %cst_20 = arith.constant dense<0.000000e+00> : vector<16x32xf32>
    %35 = tpu.matmul %31, %34, %cst_20 {dimension_numbers = #tpu.dot_dimension_numbers<[1], [0], [0], [1], [0, 0, 1, 1], [], []>} : vector<16x32xf32>, vector<32x32xf32>, vector<16x32xf32> -> vector<16x32xf32>
    %36 = arith.addf %33, %35 : vector<16x32xf32>
    %37 = arith.subf %5, %6 : vector<16x32xf32>
    %38 = arith.mulf %36, %37 : vector<16x32xf32>
    %cst_21 = arith.constant dense<0.000000e+00> : vector<16xf32>
    %39 = vector.multi_reduction <add>, %38, %cst_21 [1] : vector<16x32xf32> to vector<16xf32>
    %40 = vector.shape_cast %39 : vector<16xf32> to vector<16x1xf32>
    %cst_22 = arith.constant 0.000000e+00 : f32
    %41 = vector.broadcast %cst_22 : f32 to vector<16x1xf32>
    %42 = arith.subf %41, %40 : vector<16x1xf32>
    %cst_23 = arith.constant 0.000000e+00 : f32
    %43 = vector.broadcast %cst_23 : f32 to vector<16x1xf32>
    %44 = arith.maximumf %42, %43 : vector<16x1xf32>
    %45 = math.absf %40 : vector<16x1xf32>
    %cst_24 = arith.constant 0.000000e+00 : f32
    %46 = vector.broadcast %cst_24 : f32 to vector<16x1xf32>
    %47 = arith.subf %46, %45 : vector<16x1xf32>
    %48 = math.exp %47 : vector<16x1xf32>
    %49 = math.log1p %48 : vector<16x1xf32>
    %50 = arith.addf %44, %49 : vector<16x1xf32>
    %51 = arith.mulf %22, %22 : vector<16x32xf32>
    %52 = arith.mulf %31, %31 : vector<16x32xf32>
    %53 = arith.addf %51, %52 : vector<16x32xf32>
    %54 = arith.mulf %5, %5 : vector<16x32xf32>
    %55 = arith.addf %53, %54 : vector<16x32xf32>
    %56 = arith.mulf %6, %6 : vector<16x32xf32>
    %57 = arith.addf %55, %56 : vector<16x32xf32>
    %cst_25 = arith.constant dense<0.000000e+00> : vector<16xf32>
    %58 = vector.multi_reduction <add>, %57, %cst_25 [1] : vector<16x32xf32> to vector<16xf32>
    %59 = vector.shape_cast %58 : vector<16xf32> to vector<16x1xf32>
    %cst_26 = arith.constant 5.000000e-01 : f32
    %60 = vector.broadcast %cst_26 : f32 to vector<16x1xf32>
    %61 = arith.mulf %60, %59 : vector<16x1xf32>
    %cst_27 = arith.constant 9.99999974E-6 : f32
    %62 = vector.broadcast %cst_27 : f32 to vector<16x1xf32>
    %63 = arith.mulf %62, %61 : vector<16x1xf32>
    %64 = arith.addf %50, %63 : vector<16x1xf32>
    %c1_i32 = arith.constant 1 : i32
    %65 = arith.muli %arg0, %c1_i32 : i32
    %66 = arith.addi %65, %arg1 : i32
    %c16_i32 = arith.constant 16 : i32
    %67 = arith.muli %66, %c16_i32 : i32
    %68 = tpu.iota {dimensions = array<i32: 0>} : vector<16x1xi32>
    %69 = vector.broadcast %67 : i32 to vector<16x1xi32>
    %70 = arith.addi %69, %68 : vector<16x1xi32>
    %c10_i32 = arith.constant 10 : i32
    %71 = vector.broadcast %c10_i32 : i32 to vector<16x1xi32>
    %72 = arith.cmpi slt, %70, %71 : vector<16x1xi32>
    %cst_28 = arith.constant 0.000000e+00 : f32
    %73 = vector.broadcast %cst_28 : f32 to vector<16x1xf32>
    %74 = arith.select %72, %64, %73 : vector<16x1xi1>, vector<16x1xf32>
    %c0_29 = arith.constant 0 : index
    %c0_30 = arith.constant 0 : index
    %75 = vector.load %arg12[%c0_29, %c0_30] : memref<1x128xf32, #tpu.memory_space<vmem>>, vector<1x128xf32>
    %76 = vector.shape_cast %74 : vector<16x1xf32> to vector<1x16x1xf32>
    %cst_31 = arith.constant dense<0.000000e+00> : vector<1xf32>
    %77 = vector.multi_reduction <add>, %76, %cst_31 [1, 2] : vector<1x16x1xf32> to vector<1xf32>
    %78 = vector.shape_cast %77 : vector<1xf32> to vector<1x1x1xf32>
    %79 = vector.extract %78[0, 0, 0] : f32 from vector<1x1x1xf32>
    %80 = vector.broadcast %79 : f32 to vector<1x1xf32>
    %81 = vector.broadcast %80 : vector<1x1xf32> to vector<1x128xf32>
    %82 = arith.addf %75, %81 : vector<1x128xf32>
    %c0_32 = arith.constant 0 : index
    %c0_33 = arith.constant 0 : index
    %83 = vector.load %arg12[%c0_32, %c0_33] : memref<1x128xf32, #tpu.memory_space<vmem>>, vector<1x128xf32>
    tpu.vector_store %arg12[%c0_32, %c0_33], %82 {strides = array<i32>} : memref<1x128xf32, #tpu.memory_space<vmem>>, vector<1x128xf32>,
    %c0_i32_34 = arith.constant 0 : i32
    %84 = arith.cmpi eq, %arg1, %c0_i32_34 : i32
    %85 = arith.extui %84 : i1 to i32
    %c0_i32_35 = arith.constant 0 : i32
    %86 = arith.cmpi ne, %85, %c0_i32_35 : i32
    scf.if %86 {
      %c0_36 = arith.constant 0 : index
      %c0_37 = arith.constant 0 : index
      %87 = vector.load %arg12[%c0_36, %c0_37] : memref<1x128xf32, #tpu.memory_space<vmem>>, vector<1x128xf32>
      %c0_38 = arith.constant 0 : index
      %c0_39 = arith.constant 0 : index
      %88 = vector.load %arg11[%c0_38, %c0_39] : memref<1x128xf32, #tpu.memory_space<vmem>>, vector<1x128xf32>
      tpu.vector_store %arg11[%c0_38, %c0_39], %87 {strides = array<i32>} : memref<1x128xf32, #tpu.memory_space<vmem>>, vector<1x128xf32>,
    } else {
    }
    return
  }
  func.func @transform_0(%arg0: i32, %arg1: i32) -> (i32, i32) {
    %c1_i32 = arith.constant 1 : i32
    %0 = arith.muli %arg0, %c1_i32 : i32
    %1 = arith.addi %0, %arg1 : i32
    %c0_i32 = arith.constant 0 : i32
    %2 = arith.minsi %1, %c0_i32 : i32
    %c0_i32_0 = arith.constant 0 : i32
    %c0_i32_1 = arith.constant 0 : i32
    return %2, %c0_i32_0 : i32, i32
  }
  func.func @transform_1(%arg0: i32, %arg1: i32) -> (i32, i32) {
    %c1_i32 = arith.constant 1 : i32
    %0 = arith.muli %arg0, %c1_i32 : i32
    %1 = arith.addi %0, %arg1 : i32
    %c0_i32 = arith.constant 0 : i32
    %2 = arith.minsi %1, %c0_i32 : i32
    %c0_i32_0 = arith.constant 0 : i32
    %c0_i32_1 = arith.constant 0 : i32
    return %2, %c0_i32_0 : i32, i32
  }
  func.func @transform_2(%arg0: i32, %arg1: i32) -> (i32, i32) {
    %c1_i32 = arith.constant 1 : i32
    %0 = arith.muli %arg0, %c1_i32 : i32
    %1 = arith.addi %0, %arg1 : i32
    %c0_i32 = arith.constant 0 : i32
    %2 = arith.minsi %1, %c0_i32 : i32
    %c0_i32_0 = arith.constant 0 : i32
    %c0_i32_1 = arith.constant 0 : i32
    return %2, %c0_i32_0 : i32, i32
  }
  func.func @transform_3(%arg0: i32, %arg1: i32) -> (i32, i32) {
    %c1_i32 = arith.constant 1 : i32
    %0 = arith.muli %arg0, %c1_i32 : i32
    %1 = arith.addi %0, %arg1 : i32
    %c0_i32 = arith.constant 0 : i32
    %2 = arith.minsi %1, %c0_i32 : i32
    %c0_i32_0 = arith.constant 0 : i32
    %c0_i32_1 = arith.constant 0 : i32
    return %2, %c0_i32_0 : i32, i32
  }
  func.func @transform_4(%arg0: i32, %arg1: i32) -> (i32, i32) {
    %c0_i32 = arith.constant 0 : i32
    %c0_i32_0 = arith.constant 0 : i32
    %c0_i32_1 = arith.constant 0 : i32
    return %c0_i32, %c0_i32_0 : i32, i32
  }
  func.func @transform_5(%arg0: i32, %arg1: i32) -> (i32, i32) {
    %c0_i32 = arith.constant 0 : i32
    %c0_i32_0 = arith.constant 0 : i32
    %c0_i32_1 = arith.constant 0 : i32
    return %c0_i32, %c0_i32_0 : i32, i32
  }
  func.func @transform_6(%arg0: i32, %arg1: i32) -> (i32, i32) {
    %c0_i32 = arith.constant 0 : i32
    %c0_i32_0 = arith.constant 0 : i32
    %c0_i32_1 = arith.constant 0 : i32
    return %c0_i32, %c0_i32_0 : i32, i32
  }
  func.func @transform_7(%arg0: i32, %arg1: i32) -> (i32, i32) {
    %c0_i32 = arith.constant 0 : i32
    %c0_i32_0 = arith.constant 0 : i32
    %c0_i32_1 = arith.constant 0 : i32
    return %c0_i32, %c0_i32_0 : i32, i32
  }
  func.func @transform_8(%arg0: i32, %arg1: i32) -> (i32, i32) {
    %c0_i32 = arith.constant 0 : i32
    %c0_i32_0 = arith.constant 0 : i32
    %c0_i32_1 = arith.constant 0 : i32
    return %c0_i32, %c0_i32_0 : i32, i32
  }
  func.func @transform_9(%arg0: i32, %arg1: i32) -> (i32, i32) {
    %c0_i32 = arith.constant 0 : i32
    %c0_i32_0 = arith.constant 0 : i32
    return %c0_i32, %arg0 : i32, i32
  }
}

</mosaic_0001>

<llo_original>
// kernel: tpu_custom_call.1
$region0: #{tpu_custom_call.1}
  #allocation0 [shape = 'u32[]', space=smem, size = 0x4, offset = 0x4, fixed_abs, tag = 'smem constant byte address 0x4 - core index']
  #allocation1 [shape = 'u32[144,128]{1,0:T(1,128)}', space=vmem, size = 0x12000, scoped, tag = 'internal scratch']
  #allocation2 [shape = 'f32[1,128]{1,0:T(1,128)}', space=vmem, size = 0x200, scoped, tag = 'scratch operand']
  %s0 = inlined_call_operand.hbm [shape: f32[10,32], index: 0, kind: input, shape index: {}]
  %s1 = inlined_call_operand.hbm [shape: f32[10,32], index: 1, kind: input, shape index: {}]
  %s2 = inlined_call_operand.hbm [shape: f32[10,32], index: 2, kind: input, shape index: {}]
  %s3 = inlined_call_operand.hbm [shape: f32[10,32], index: 3, kind: input, shape index: {}]
  %s4 = inlined_call_operand.vmem [shape: f32[32,2], index: 4, kind: input, shape index: {}]
  %s5 = inlined_call_operand.vmem [shape: f32[32,2], index: 5, kind: input, shape index: {}]
  %s6 = inlined_call_operand.vmem [shape: f32[2,32], index: 6, kind: input, shape index: {}]
  %s7 = inlined_call_operand.vmem [shape: f32[32,32], index: 7, kind: input, shape index: {}]
  %s8 = inlined_call_operand.vmem [shape: f32[32,32], index: 8, kind: input, shape index: {}]
  %s9 = inlined_call_operand.hbm [shape: f32[1,128], index: 9, kind: output, shape index: {}]
  %s10 = sld [smem:[#allocation0]]
  $region70: #{tpu_custom_call.1} parent=0
    _
  %s12 = ssub.s32 1, %s10
  %s13 = scalar_select 0, %s12, %s10
  $region1: #{tpu_custom_call.1} parent=0
    #allocation3 [shape = 'u8[8192]{0}', space=vmem, size = 0x2000, scoped, tag = 'input window, operand 0, single buffered']
    #allocation4 [shape = 's32[1]{0}', space=sflag, size = 0x4, scoped, tag = 'scoped memory for tpu_custom_call.1']
    #allocation5 [shape = 's32[1]{0}', space=sflag, size = 0x4, scoped, tag = 'scoped memory for tpu_custom_call.1']
    #allocation6 [shape = 'u8[8192]{0}', space=vmem, size = 0x2000, scoped, tag = 'input window, operand 1, single buffered']
    #allocation7 [shape = 's32[1]{0}', space=sflag, size = 0x4, scoped, tag = 'scoped memory for tpu_custom_call.1']
    #allocation8 [shape = 'u8[8192]{0}', space=vmem, size = 0x2000, scoped, tag = 'input window, operand 2, single buffered']
    #allocation9 [shape = 'u8[8192]{0}', space=vmem, size = 0x2000, scoped, tag = 'input window, operand 3, single buffered']
    #allocation10 [shape = 's32[1]{0}', space=sflag, size = 0x4, scoped, tag = 'scoped memory for tpu_custom_call.1']
    #allocation11 [shape = 'u8[512]{0}', space=vmem, size = 0x400, scoped, tag = 'output window, operand 0, single buffered']
    %14 = vsyncpa [#allocation4], 0
    %15 = vsyncpa [#allocation7], 0
    %16 = vsyncpa [#allocation10], 0
    %17 = vsyncpa [#allocation5], 0
    // Predicated region
    $region2: #{tpu_custom_call.1} parent=1 // pred_check
      _
    $region3: #{tpu_custom_call.1} parent=1 // pred_check_branch
      %19 = sbr.rel (0) target = $region5
    $region4: #{tpu_custom_call.1} parent=1 // pred_region
      %s20 = sadd.s32 0, 0
      %p21 = scmp.lt.s32.totalorder %s20, 0
      %s22 = scalar_select %p21, %s20, 0
      %s23 = smul.u32 2, %s22
      %s25 = ssub.s32 256, 256
      %26 = vsyncadd [#allocation4], %s25
      %s27 = smul.addr %s23, 128
      %s28 = scalar_lea.hbm %s0, %s27
      %s29 = sshll.u32 [#allocation3], 4
      %s30 = int_to_ptr.vmem [resolvable:$true] %s29
      %35 = dma.hbm_to_vmem [thread:$0]  %s28, 256, %s30, [#allocation4], 128, 128, 8
    $region5: #{tpu_custom_call.1} parent=1 // pred_fallthru
      _
    // Predicated region
    $region6: #{tpu_custom_call.1} parent=1 // pred_check
      _
    $region7: #{tpu_custom_call.1} parent=1 // pred_check_branch
      %37 = sbr.rel (0) target = $region9
    $region8: #{tpu_custom_call.1} parent=1 // pred_region
      %s38 = sadd.s32 0, 0
      %p39 = scmp.lt.s32.totalorder %s38, 0
      %s40 = scalar_select %p39, %s38, 0
      %s41 = smul.u32 2, %s40
      %s43 = ssub.s32 256, 256
      %44 = vsyncadd [#allocation7], %s43
      %s45 = smul.addr %s41, 128
      %s46 = scalar_lea.hbm %s1, %s45
      %s47 = sshll.u32 [#allocation6], 4
      %s48 = int_to_ptr.vmem [resolvable:$true] %s47
      %53 = dma.hbm_to_vmem [thread:$0]  %s46, 256, %s48, [#allocation7], 128, 128, 8
    $region9: #{tpu_custom_call.1} parent=1 // pred_fallthru
      _
    // Predicated region
    $region10: #{tpu_custom_call.1} parent=1 // pred_check
      _
    $region11: #{tpu_custom_call.1} parent=1 // pred_check_branch
      %55 = sbr.rel (0) target = $region13
    $region12: #{tpu_custom_call.1} parent=1 // pred_region
      %s56 = sadd.s32 0, 0
      %p57 = scmp.lt.s32.totalorder %s56, 0
      %s58 = scalar_select %p57, %s56, 0
      %s59 = smul.u32 2, %s58
      %s61 = ssub.s32 256, 256
      %62 = vsyncadd [#allocation7], %s61
      %s63 = smul.addr %s59, 128
      %s64 = scalar_lea.hbm %s2, %s63
      %s65 = sshll.u32 [#allocation8], 4
      %s66 = int_to_ptr.vmem [resolvable:$true] %s65
      %71 = dma.hbm_to_vmem [thread:$0]  %s64, 256, %s66, [#allocation7], 128, 128, 8
    $region13: #{tpu_custom_call.1} parent=1 // pred_fallthru
      _
    // Predicated region
    $region14: #{tpu_custom_call.1} parent=1 // pred_check
      _
    $region15: #{tpu_custom_call.1} parent=1 // pred_check_branch
      %73 = sbr.rel (0) target = $region17
    $region16: #{tpu_custom_call.1} parent=1 // pred_region
      %s74 = sadd.s32 0, 0
      %p75 = scmp.lt.s32.totalorder %s74, 0
      %s76 = scalar_select %p75, %s74, 0
      %s77 = smul.u32 2, %s76
      %s79 = ssub.s32 256, 256
      %80 = vsyncadd [#allocation10], %s79
      %s81 = smul.addr %s77, 128
      %s82 = scalar_lea.hbm %s3, %s81
      %s83 = sshll.u32 [#allocation9], 4
      %s84 = int_to_ptr.vmem [resolvable:$true] %s83
      %89 = dma.hbm_to_vmem [thread:$0]  %s82, 256, %s84, [#allocation10], 128, 128, 8
    $region17: #{tpu_custom_call.1} parent=1 // pred_fallthru
      _
    // Predicated region
    $region18: #{tpu_custom_call.1} parent=1 // pred_check
      _
    $region19: #{tpu_custom_call.1} parent=1 // pred_check_branch
      %91 = sbr.rel (0) target = $region21
    $region20: #{tpu_custom_call.1} parent=1 // pred_region
      _
    $region21: #{tpu_custom_call.1} parent=1 // pred_fallthru
      _
    // Predicated region
    $region22: #{tpu_custom_call.1} parent=1 // pred_check
      _
    $region23: #{tpu_custom_call.1} parent=1 // pred_check_branch
      %93 = sbr.rel (0) target = $region25
    $region24: #{tpu_custom_call.1} parent=1 // pred_region
      _
    $region25: #{tpu_custom_call.1} parent=1 // pred_fallthru
      _
    // Predicated region
    $region26: #{tpu_custom_call.1} parent=1 // pred_check
      _
    $region27: #{tpu_custom_call.1} parent=1 // pred_check_branch
      %95 = sbr.rel (0) target = $region29
    $region28: #{tpu_custom_call.1} parent=1 // pred_region
      _
    $region29: #{tpu_custom_call.1} parent=1 // pred_fallthru
      _
    // Predicated region
    $region30: #{tpu_custom_call.1} parent=1 // pred_check
      _
    $region31: #{tpu_custom_call.1} parent=1 // pred_check_branch
      %97 = sbr.rel (0) target = $region33
    $region32: #{tpu_custom_call.1} parent=1 // pred_region
      _
    $region33: #{tpu_custom_call.1} parent=1 // pred_fallthru
      _
    // Predicated region
    $region34: #{tpu_custom_call.1} parent=1 // pred_check
      _
    $region35: #{tpu_custom_call.1} parent=1 // pred_check_branch
      %99 = sbr.rel (0) target = $region37
    $region36: #{tpu_custom_call.1} parent=1 // pred_region
      _
    $region37: #{tpu_custom_call.1} parent=1 // pred_fallthru
      _
    // Predicated region
    $region38: #{tpu_custom_call.1} parent=1 // pred_check
      _
    $region39: #{tpu_custom_call.1} parent=1 // pred_check_branch
      %101 = sbr.rel (0) target = $region41
    $region40: #{tpu_custom_call.1} parent=1 // pred_region
      %102 = dma.done [#allocation4], 256
    $region41: #{tpu_custom_call.1} parent=1 // pred_fallthru
      _
    // Predicated region
    $region42: #{tpu_custom_call.1} parent=1 // pred_check
      _
    $region43: #{tpu_custom_call.1} parent=1 // pred_check_branch
      %104 = sbr.rel (0) target = $region45
    $region44: #{tpu_custom_call.1} parent=1 // pred_region
      %105 = dma.done [#allocation7], 256
    $region45: #{tpu_custom_call.1} parent=1 // pred_fallthru
      _
    // Predicated region
    $region46: #{tpu_custom_call.1} parent=1 // pred_check
      _
    $region47: #{tpu_custom_call.1} parent=1 // pred_check_branch
      %107 = sbr.rel (0) target = $region49
    $region48: #{tpu_custom_call.1} parent=1 // pred_region
      %108 = dma.done [#allocation7], 256
    $region49: #{tpu_custom_call.1} parent=1 // pred_fallthru
      _
    // Predicated region
    $region50: #{tpu_custom_call.1} parent=1 // pred_check
      _
    $region51: #{tpu_custom_call.1} parent=1 // pred_check_branch
      %110 = sbr.rel (0) target = $region53
    $region52: #{tpu_custom_call.1} parent=1 // pred_region
      %111 = dma.done [#allocation10], 256
    $region53: #{tpu_custom_call.1} parent=1 // pred_fallthru
      _
    %s112 = sadd.s32 0, 0
    %p113 = scmp.lt.s32.totalorder %s112, 0
    %s114 = scalar_select %p113, %s112, 0
    %s115 = smul.u32 2, %s114
    %s116 = sadd.s32 0, 0
    %p117 = scmp.lt.s32.totalorder %s116, 0
    %s118 = scalar_select %p117, %s116, 0
    %s119 = smul.u32 2, %s118
    %s120 = sadd.s32 0, 0
    %p121 = scmp.lt.s32.totalorder %s120, 0
    %s122 = scalar_select %p121, %s120, 0
    %s123 = smul.u32 2, %s122
    %s124 = sadd.s32 0, 0
    %p125 = scmp.lt.s32.totalorder %s124, 0
    %s126 = scalar_select %p125, %s124, 0
    %s127 = smul.u32 2, %s126
    %p128 = scmp.eq.s32.totalorder 0, 0
    // Predicated region
    $region54: #{tpu_custom_call.1} parent=1 // pred_check
      %p129 = pneg %p128
    $region55: #{tpu_custom_call.1} parent=1 // pred_check_branch
      %131 = sbr.rel (%p129) target = $region57
    $region56: #{tpu_custom_call.1} parent=1 // pred_region
      %132 = vst [vmem:[#allocation2] sm:$0x1] 0.0
    $region57: #{tpu_custom_call.1} parent=1 // pred_fallthru
      _
    %v133 = vld [vmem:[#allocation3] sm:$0xff]
    %v134 = vld [vmem:[#allocation3 + $0x8] sm:$0xff]
    %v135 = vld [vmem:[#allocation6] sm:$0xff]
    %v136 = vld [vmem:[#allocation6 + $0x8] sm:$0xff]
    %v137 = vld [vmem:[#allocation8] sm:$0xff]
    %v138 = vld [vmem:[#allocation8 + $0x8] sm:$0xff]
    %v139 = vld [vmem:[#allocation9] sm:$0xff]
    %v140 = vld [vmem:[#allocation9 + $0x8] sm:$0xff]
    %v141 = vld [vmem:[%s6] sm:$0x3]
    %v142 = vld [vmem:[%s4] sm:$0xff]
    %v143 = vld [vmem:[%s4 + $0x8] sm:$0xff]
    %v144 = vld [vmem:[%s4 + $0x10] sm:$0xff]
    %v145 = vld [vmem:[%s4 + $0x18] sm:$0xff]
    %vm146 = vcmask 261120
    %v148 = vsel %vm146, %v135, 0
    %v151 = vsel %vm146, %v136, 0
    %153 = vmatprep.subr.mxu0 0.0
    %154 = vmatpush1.msra.mxu0 %v142
    %155 = vmatprep.subr.mxu0 0.0
    %156 = vmatpush1.msra.mxu0 %v143
    %157 = vmatprep.subr.mxu0 0.0
    %158 = vmatpush1.msra.mxu0 %v144
    %159 = vmatprep.subr.mxu0 0.0
    %160 = vmatpush1.msra.mxu0 %v145
    %161 = vmatprep.subr.mxu0 0.0
    %162 = vmatpush1.msra.mxu0 0.0
    %163 = vmatprep.subr.mxu0 0.0
    %164 = vmatpush1.msra.mxu0 0.0
    %165 = vmatprep.subr.mxu0 0.0
    %166 = vmatpush1.msra.mxu0 0.0
    %167 = vmatprep.subr.mxu0 0.0
    %168 = vmatpush1.msra.mxu0 0.0
    %169 = vmatprep.subr.mxu0 0.0
    %170 = vmatpush1.msra.mxu0 0.0
    %171 = vmatprep.subr.mxu0 0.0
    %172 = vmatpush1.msra.mxu0 0.0
    %173 = vmatprep.subr.mxu0 0.0
    %174 = vmatpush1.msra.mxu0 0.0
    %175 = vmatprep.subr.mxu0 0.0
    %176 = vmatpush1.msra.mxu0 0.0
    %177 = vmatprep.subr.mxu0 0.0
    %178 = vmatpush1.msra.mxu0 0.0
    %179 = vmatprep.subr.mxu0 0.0
    %180 = vmatpush1.msra.mxu0 0.0
    %181 = vmatprep.subr.mxu0 0.0
    %182 = vmatpush1.msra.mxu0 0.0
    %183 = vmatprep.subr.mxu0 0.0
    %184 = vmatpush1.msra.mxu0 0.0
    %185 = vmatprep.subr.mxu0 0.0
    %186 = vmatpush1.msra.mxu0 0.0
    %187 = vmatprep.subr.mxu0 0.0
    %188 = vmatpush1.msra.mxu0 0.0
    %189 = vmatprep.subr.mxu0 0.0
    %190 = vmatpush1.msra.mxu0 0.0
    %191 = vmatprep.subr.mxu0 0.0
    %192 = vmatpush1.msra.mxu0 0.0
    %193 = vmatprep.subr.mxu0 0.0
    %194 = vmatpush1.msra.mxu0 0.0
    %195 = vmatprep.subr.mxu0 0.0
    %196 = vmatpush1.msra.mxu0 0.0
    %197 = vmatprep.subr.mxu0 0.0
    %198 = vmatpush1.msra.mxu0 0.0
    %199 = vmatprep.subr.mxu0 0.0
    %200 = vmatpush1.msra.mxu0 0.0
    %201 = vmatprep.subr.mxu0 0.0
    %202 = vmatpush1.msra.mxu0 0.0
    %203 = vmatprep.subr.mxu0 0.0
    %204 = vmatpush1.msra.mxu0 0.0
    %205 = vmatprep.subr.mxu0 0.0
    %206 = vmatpush1.msra.mxu0 0.0
    %207 = vmatprep.subr.mxu0 0.0
    %208 = vmatpush1.msra.mxu0 0.0
    %209 = vmatprep.subr.mxu0 0.0
    %210 = vmatpush1.msra.mxu0 0.0
    %211 = vmatprep.subr.mxu0 0.0
    %212 = vmatpush1.msra.mxu0 0.0
    %213 = vmatprep.subr.mxu0 0.0
    %214 = vmatpush1.msra.mxu0 0.0
    %215 = vmatprep.subr.mxu0 0.0
    %216 = vmatpush1.msra.mxu0 0.0
    %217 = vmatprep.mubr.f32.mxu0 0.0
    %218 = vmatmul.mubr.f32.gmra.mrb[0].mxu0 %v148
    %v219 = vpop.f32.mrb[0].mxu0
    %v220 = vadd.f32 0.0, %v219
    %v221 = vpop.f32.mrb[0].mxu0
    %222 = vmatprep.mubr.f32.mxu0 0.0
    %223 = vmatmul.mubr.f32.gmra.mrb[0].mxu0 %v151
    %v224 = vpop.f32.mrb[0].mxu0
    %v225 = vadd.f32 0.0, %v224
    %v226 = vpop.f32.mrb[0].mxu0
    %227 = vdwg.mxu0
    %v228 = vld [vmem:[%s5] sm:$0xff]
    %v229 = vld [vmem:[%s5 + $0x8] sm:$0xff]
    %v230 = vld [vmem:[%s5 + $0x10] sm:$0xff]
    %v231 = vld [vmem:[%s5 + $0x18] sm:$0xff]
    %v233 = vsel %vm146, %v133, 0
    %v236 = vsel %vm146, %v134, 0
    %238 = vmatprep.subr.mxu0 0.0
    %239 = vmatpush1.msra.mxu0 %v228
    %240 = vmatprep.subr.mxu0 0.0
    %241 = vmatpush1.msra.mxu0 %v229
    %242 = vmatprep.subr.mxu0 0.0
    %243 = vmatpush1.msra.mxu0 %v230
    %244 = vmatprep.subr.mxu0 0.0
    %245 = vmatpush1.msra.mxu0 %v231
    %246 = vmatprep.subr.mxu0 0.0
    %247 = vmatpush1.msra.mxu0 0.0
    %248 = vmatprep.subr.mxu0 0.0
    %249 = vmatpush1.msra.mxu0 0.0
    %250 = vmatprep.subr.mxu0 0.0
    %251 = vmatpush1.msra.mxu0 0.0
    %252 = vmatprep.subr.mxu0 0.0
    %253 = vmatpush1.msra.mxu0 0.0
    %254 = vmatprep.subr.mxu0 0.0
    %255 = vmatpush1.msra.mxu0 0.0
    %256 = vmatprep.subr.mxu0 0.0
    %257 = vmatpush1.msra.mxu0 0.0
    %258 = vmatprep.subr.mxu0 0.0
    %259 = vmatpush1.msra.mxu0 0.0
    %260 = vmatprep.subr.mxu0 0.0
    %261 = vmatpush1.msra.mxu0 0.0
    %262 = vmatprep.subr.mxu0 0.0
    %263 = vmatpush1.msra.mxu0 0.0
    %264 = vmatprep.subr.mxu0 0.0
    %265 = vmatpush1.msra.mxu0 0.0
    %266 = vmatprep.subr.mxu0 0.0
    %267 = vmatpush1.msra.mxu0 0.0
    %268 = vmatprep.subr.mxu0 0.0
    %269 = vmatpush1.msra.mxu0 0.0
    %270 = vmatprep.subr.mxu0 0.0
    %271 = vmatpush1.msra.mxu0 0.0
    %272 = vmatprep.subr.mxu0 0.0
    %273 = vmatpush1.msra.mxu0 0.0
    %274 = vmatprep.subr.mxu0 0.0
    %275 = vmatpush1.msra.mxu0 0.0
    %276 = vmatprep.subr.mxu0 0.0
    %277 = vmatpush1.msra.mxu0 0.0
    %278 = vmatprep.subr.mxu0 0.0
    %279 = vmatpush1.msra.mxu0 0.0
    %280 = vmatprep.subr.mxu0 0.0
    %281 = vmatpush1.msra.mxu0 0.0
    %282 = vmatprep.subr.mxu0 0.0
    %283 = vmatpush1.msra.mxu0 0.0
    %284 = vmatprep.subr.mxu0 0.0
    %285 = vmatpush1.msra.mxu0 0.0
    %286 = vmatprep.subr.mxu0 0.0
    %287 = vmatpush1.msra.mxu0 0.0
    %288 = vmatprep.subr.mxu0 0.0
    %289 = vmatpush1.msra.mxu0 0.0
    %290 = vmatprep.subr.mxu0 0.0
    %291 = vmatpush1.msra.mxu0 0.0
    %292 = vmatprep.subr.mxu0 0.0
    %293 = vmatpush1.msra.mxu0 0.0
    %294 = vmatprep.subr.mxu0 0.0
    %295 = vmatpush1.msra.mxu0 0.0
    %296 = vmatprep.subr.mxu0 0.0
    %297 = vmatpush1.msra.mxu0 0.0
    %298 = vmatprep.subr.mxu0 0.0
    %299 = vmatpush1.msra.mxu0 0.0
    %300 = vmatprep.subr.mxu0 0.0
    %301 = vmatpush1.msra.mxu0 0.0
    %302 = vmatprep.mubr.f32.mxu0 0.0
    %303 = vmatmul.mubr.f32.gmra.mrb[0].mxu0 %v233
    %v304 = vpop.f32.mrb[0].mxu0
    %v305 = vadd.f32 0.0, %v304
    %v306 = vpop.f32.mrb[0].mxu0
    %307 = vmatprep.mubr.f32.mxu0 0.0
    %308 = vmatmul.mubr.f32.gmra.mrb[0].mxu0 %v236
    %v309 = vpop.f32.mrb[0].mxu0
    %v310 = vadd.f32 0.0, %v309
    %v311 = vpop.f32.mrb[0].mxu0
    %312 = vdwg.mxu0
    %314 = vset.pattern.permute.xlu0 0
    %315 = vperm.xlu0 %314, %v220
    %v316 = vpop.permute.xlu0 %315
    %319 = vset.pattern.permute.xlu0 0
    %320 = vperm.xlu0 %319, %v225
    %v321 = vpop.permute.xlu0 %320
    %v323 = vmul.f32 %v133, %v316
    %v324 = vmul.f32 %v134, %v321
    %326 = vset.pattern.permute.xlu0 0
    %327 = vperm.xlu0 %326, %v305
    %v328 = vpop.permute.xlu0 %327
    %331 = vset.pattern.permute.xlu0 0
    %332 = vperm.xlu0 %331, %v310
    %v333 = vpop.permute.xlu0 %332
    %v335 = vmul.f32 %v135, %v328
    %v336 = vmul.f32 %v136, %v333
    %v337 = vadd.f32 %v323, %v335
    %v338 = vadd.f32 %v324, %v336
    %v339 = vlaneseq
    %v340 = vshrl.u32 %v339, 7
    %v341 = vsub.s32 0, %v340
    %v342 = vrot.slane %v141, %v341
    %v343 = vadd.f32 %v337, %v342
    %v344 = vadd.f32 %v338, %v342
    %345 = vset.pattern.permute.xlu0 1
    %346 = vperm.xlu0 %345, %v220
    %v347 = vpop.permute.xlu0 %346
    %349 = vset.pattern.permute.xlu0 1
    %350 = vperm.xlu0 %349, %v225
    %v351 = vpop.permute.xlu0 %350
    %v353 = vmul.f32 %v133, %v347
    %v354 = vmul.f32 %v134, %v351
    %355 = vset.pattern.permute.xlu0 1
    %356 = vperm.xlu0 %355, %v305
    %v357 = vpop.permute.xlu0 %356
    %359 = vset.pattern.permute.xlu0 1
    %360 = vperm.xlu0 %359, %v310
    %v361 = vpop.permute.xlu0 %360
    %v363 = vmul.f32 %v135, %v357
    %v364 = vmul.f32 %v136, %v361
    %v365 = vadd.f32 %v353, %v363
    %v366 = vadd.f32 %v354, %v364
    %v367 = vlaneseq
    %v368 = vshrl.u32 %v367, 7
    %v369 = vsub.s32 1, %v368
    %v370 = vrot.slane %v141, %v369
    %v371 = vadd.f32 %v365, %v370
    %v372 = vadd.f32 %v366, %v370
    %v373 = vld [vmem:[%s7] sm:$0xff]
    %v374 = vld [vmem:[%s7 + $0x8] sm:$0xff]
    %v375 = vld [vmem:[%s7 + $0x10] sm:$0xff]
    %v376 = vld [vmem:[%s7 + $0x18] sm:$0xff]
    %v377 = vld [vmem:[%s8] sm:$0xff]
    %v378 = vld [vmem:[%s8 + $0x8] sm:$0xff]
    %v379 = vld [vmem:[%s8 + $0x10] sm:$0xff]
    %v380 = vld [vmem:[%s8 + $0x18] sm:$0xff]
    %v382 = vsel %vm146, %v371, 0
    %v385 = vsel %vm146, %v372, 0
    %387 = vmatprep.subr.mxu0 0.0
    %388 = vmatpush1.msra.mxu0 %v377
    %389 = vmatprep.subr.mxu0 0.0
    %390 = vmatpush1.msra.mxu0 %v378
    %391 = vmatprep.subr.mxu0 0.0
    %392 = vmatpush1.msra.mxu0 %v379
    %393 = vmatprep.subr.mxu0 0.0
    %394 = vmatpush1.msra.mxu0 %v380
    %395 = vmatprep.subr.mxu0 0.0
    %396 = vmatpush1.msra.mxu0 0.0
    %397 = vmatprep.subr.mxu0 0.0
    %398 = vmatpush1.msra.mxu0 0.0
    %399 = vmatprep.subr.mxu0 0.0
    %400 = vmatpush1.msra.mxu0 0.0
    %401 = vmatprep.subr.mxu0 0.0
    %402 = vmatpush1.msra.mxu0 0.0
    %403 = vmatprep.subr.mxu0 0.0
    %404 = vmatpush1.msra.mxu0 0.0
    %405 = vmatprep.subr.mxu0 0.0
    %406 = vmatpush1.msra.mxu0 0.0
    %407 = vmatprep.subr.mxu0 0.0
    %408 = vmatpush1.msra.mxu0 0.0
    %409 = vmatprep.subr.mxu0 0.0
    %410 = vmatpush1.msra.mxu0 0.0
    %411 = vmatprep.subr.mxu0 0.0
    %412 = vmatpush1.msra.mxu0 0.0
    %413 = vmatprep.subr.mxu0 0.0
    %414 = vmatpush1.msra.mxu0 0.0
    %415 = vmatprep.subr.mxu0 0.0
    %416 = vmatpush1.msra.mxu0 0.0
    %417 = vmatprep.subr.mxu0 0.0
    %418 = vmatpush1.msra.mxu0 0.0
    %419 = vmatprep.subr.mxu0 0.0
    %420 = vmatpush1.msra.mxu0 0.0
    %421 = vmatprep.subr.mxu0 0.0
    %422 = vmatpush1.msra.mxu0 0.0
    %423 = vmatprep.subr.mxu0 0.0
    %424 = vmatpush1.msra.mxu0 0.0
    %425 = vmatprep.subr.mxu0 0.0
    %426 = vmatpush1.msra.mxu0 0.0
    %427 = vmatprep.subr.mxu0 0.0
    %428 = vmatpush1.msra.mxu0 0.0
    %429 = vmatprep.subr.mxu0 0.0
    %430 = vmatpush1.msra.mxu0 0.0
    %431 = vmatprep.subr.mxu0 0.0
    %432 = vmatpush1.msra.mxu0 0.0
    %433 = vmatprep.subr.mxu0 0.0
    %434 = vmatpush1.msra.mxu0 0.0
    %435 = vmatprep.subr.mxu0 0.0
    %436 = vmatpush1.msra.mxu0 0.0
    %437 = vmatprep.subr.mxu0 0.0
    %438 = vmatpush1.msra.mxu0 0.0
    %439 = vmatprep.subr.mxu0 0.0
    %440 = vmatpush1.msra.mxu0 0.0
    %441 = vmatprep.subr.mxu0 0.0
    %442 = vmatpush1.msra.mxu0 0.0
    %443 = vmatprep.subr.mxu0 0.0
    %444 = vmatpush1.msra.mxu0 0.0
    %445 = vmatprep.subr.mxu0 0.0
    %446 = vmatpush1.msra.mxu0 0.0
    %447 = vmatprep.subr.mxu0 0.0
    %448 = vmatpush1.msra.mxu0 0.0
    %449 = vmatprep.subr.mxu0 0.0
    %450 = vmatpush1.msra.mxu0 0.0
    %451 = vmatprep.mubr.f32.mxu0 0.0
    %452 = vmatmul.mubr.f32.gmra.mrb[0].mxu0 %v382
    %v453 = vpop.f32.mrb[0].mxu0
    %v454 = vadd.f32 0.0, %v453
    %v455 = vpop.f32.mrb[0].mxu0
    %456 = vmatprep.mubr.f32.mxu0 0.0
    %457 = vmatmul.mubr.f32.gmra.mrb[0].mxu0 %v385
    %v458 = vpop.f32.mrb[0].mxu0
    %v459 = vadd.f32 0.0, %v458
    %v460 = vpop.f32.mrb[0].mxu0
    %461 = vdwg.mxu0
    %v463 = vsel %vm146, %v343, 0
    %v466 = vsel %vm146, %v344, 0
    %468 = vmatprep.subr.mxu0 0.0
    %469 = vmatpush1.msra.mxu0 %v373
    %470 = vmatprep.subr.mxu0 0.0
    %471 = vmatpush1.msra.mxu0 %v374
    %472 = vmatprep.subr.mxu0 0.0
    %473 = vmatpush1.msra.mxu0 %v375
    %474 = vmatprep.subr.mxu0 0.0
    %475 = vmatpush1.msra.mxu0 %v376
    %476 = vmatprep.subr.mxu0 0.0
    %477 = vmatpush1.msra.mxu0 0.0
    %478 = vmatprep.subr.mxu0 0.0
    %479 = vmatpush1.msra.mxu0 0.0
    %480 = vmatprep.subr.mxu0 0.0
    %481 = vmatpush1.msra.mxu0 0.0
    %482 = vmatprep.subr.mxu0 0.0
    %483 = vmatpush1.msra.mxu0 0.0
    %484 = vmatprep.subr.mxu0 0.0
    %485 = vmatpush1.msra.mxu0 0.0
    %486 = vmatprep.subr.mxu0 0.0
    %487 = vmatpush1.msra.mxu0 0.0
    %488 = vmatprep.subr.mxu0 0.0
    %489 = vmatpush1.msra.mxu0 0.0
    %490 = vmatprep.subr.mxu0 0.0
    %491 = vmatpush1.msra.mxu0 0.0
    %492 = vmatprep.subr.mxu0 0.0
    %493 = vmatpush1.msra.mxu0 0.0
    %494 = vmatprep.subr.mxu0 0.0
    %495 = vmatpush1.msra.mxu0 0.0
    %496 = vmatprep.subr.mxu0 0.0
    %497 = vmatpush1.msra.mxu0 0.0
    %498 = vmatprep.subr.mxu0 0.0
    %499 = vmatpush1.msra.mxu0 0.0
    %500 = vmatprep.subr.mxu0 0.0
    %501 = vmatpush1.msra.mxu0 0.0
    %502 = vmatprep.subr.mxu0 0.0
    %503 = vmatpush1.msra.mxu0 0.0
    %504 = vmatprep.subr.mxu0 0.0
    %505 = vmatpush1.msra.mxu0 0.0
    %506 = vmatprep.subr.mxu0 0.0
    %507 = vmatpush1.msra.mxu0 0.0
    %508 = vmatprep.subr.mxu0 0.0
    %509 = vmatpush1.msra.mxu0 0.0
    %510 = vmatprep.subr.mxu0 0.0
    %511 = vmatpush1.msra.mxu0 0.0
    %512 = vmatprep.subr.mxu0 0.0
    %513 = vmatpush1.msra.mxu0 0.0
    %514 = vmatprep.subr.mxu0 0.0
    %515 = vmatpush1.msra.mxu0 0.0
    %516 = vmatprep.subr.mxu0 0.0
    %517 = vmatpush1.msra.mxu0 0.0
    %518 = vmatprep.subr.mxu0 0.0
    %519 = vmatpush1.msra.mxu0 0.0
    %520 = vmatprep.subr.mxu0 0.0
    %521 = vmatpush1.msra.mxu0 0.0
    %522 = vmatprep.subr.mxu0 0.0
    %523 = vmatpush1.msra.mxu0 0.0
    %524 = vmatprep.subr.mxu0 0.0
    %525 = vmatpush1.msra.mxu0 0.0
    %526 = vmatprep.subr.mxu0 0.0
    %527 = vmatpush1.msra.mxu0 0.0
    %528 = vmatprep.subr.mxu0 0.0
    %529 = vmatpush1.msra.mxu0 0.0
    %530 = vmatprep.subr.mxu0 0.0
    %531 = vmatpush1.msra.mxu0 0.0
    %532 = vmatprep.mubr.f32.mxu0 0.0
    %533 = vmatmul.mubr.f32.gmra.mrb[0].mxu0 %v463
    %v534 = vpop.f32.mrb[0].mxu0
    %v535 = vadd.f32 %v454, %v534
    %v536 = vpop.f32.mrb[0].mxu0
    %537 = vmatprep.mubr.f32.mxu0 0.0
    %538 = vmatmul.mubr.f32.gmra.mrb[0].mxu0 %v466
    %v539 = vpop.f32.mrb[0].mxu0
    %v540 = vadd.f32 %v459, %v539
    %v541 = vpop.f32.mrb[0].mxu0
    %542 = vdwg.mxu0
    %v543 = vsub.f32 %v137, %v139
    %v544 = vsub.f32 %v138, %v140
    %v545 = vmul.f32 %v535, %v543
    %v546 = vmul.f32 %v540, %v544
    %v547 = vsel %vm146, %v545, 0.0
    %548 = vadd.xlane.f32.xlu0 %v547
    %v549 = vpop.xlane.xlu0 %548
    %v550 = vsel %vm146, %v546, 0.0
    %551 = vadd.xlane.f32.xlu0 %v550
    %v552 = vpop.xlane.xlu0 %551
    %v553 = vsub.f32 0.0, %v549
    %v554 = vsub.f32 0.0, %v552
    %v555 = vmax.f32 %v553, 0.0
    %v556 = vmax.f32 %v554, 0.0
    %v557 = vand.u32 2147483647, %v549
    %v558 = vand.u32 2147483647, %v552
    %v559 = vsub.f32 0.0, %v557
    %v560 = vsub.f32 0.0, %v558
    %v561 = vmul.f32 %v559, 1.442695
    %v562 = vpow.pop %v561
    %v563 = vmul.f32 %v560, 1.442695
    %v564 = vpow.pop %v563
    %v565 = vadd.f32 %v562, 1.0
    %v566 = vlog2.pop %v565
    %v567 = vmul.f32 %v566, 0.6931472
    %v568 = vmul.f32 -0.5, %v562
    %v569 = vadd.f32 %v568, 1.0
    %v570 = vmul.f32 %v569, %v562
    %v571 = vand.u32 2147483647, %v562
    %vm572 = vcmp.lt.f32.partialorder %v571, 0.0004427343
    %v573 = vsel %vm572, %v570, %v567
    %v574 = vadd.f32 %v564, 1.0
    %v575 = vlog2.pop %v574
    %v576 = vmul.f32 %v575, 0.6931472
    %v577 = vmul.f32 -0.5, %v564
    %v578 = vadd.f32 %v577, 1.0
    %v579 = vmul.f32 %v578, %v564
    %v580 = vand.u32 2147483647, %v564
    %vm581 = vcmp.lt.f32.partialorder %v580, 0.0004427343
    %v582 = vsel %vm581, %v579, %v576
    %v583 = vadd.f32 %v555, %v573
    %v584 = vadd.f32 %v556, %v582
    %v585 = vmul.f32 %v343, %v343
    %v586 = vmul.f32 %v344, %v344
    %v587 = vmul.f32 %v371, %v371
    %v588 = vmul.f32 %v372, %v372
    %v589 = vadd.f32 %v585, %v587
    %v590 = vadd.f32 %v586, %v588
    %v591 = vmul.f32 %v137, %v137
    %v592 = vmul.f32 %v138, %v138
    %v593 = vadd.f32 %v589, %v591
    %v594 = vadd.f32 %v590, %v592
    %v595 = vmul.f32 %v139, %v139
    %v596 = vmul.f32 %v140, %v140
    %v597 = vadd.f32 %v593, %v595
    %v598 = vadd.f32 %v594, %v596
    %v599 = vsel %vm146, %v597, 0.0
    %600 = vadd.xlane.f32.xlu0 %v599
    %v601 = vpop.xlane.xlu0 %600
    %v602 = vsel %vm146, %v598, 0.0
    %603 = vadd.xlane.f32.xlu0 %v602
    %v604 = vpop.xlane.xlu0 %603
    %v605 = vmul.f32 %v601, 0.5
    %v606 = vmul.f32 %v604, 0.5
    %v607 = vmul.f32 %v605, 1e-05
    %v608 = vmul.f32 %v606, 1e-05
    %v609 = vadd.f32 %v583, %v607
    %v610 = vadd.f32 %v584, %v608
    %s611 = sadd.s32 0, 0
    %s612 = smul.u32 %s611, 16
    %v613 = vlaneseq
    %v614 = vshrl.u32 %v613, 7
    %v615 = vadd.s32 %v614, 8
    %v616 = vstv %s612
    %v617 = vadd.s32 %v616, %v614
    %v618 = vadd.s32 %v616, %v615
    %vm619 = vcmp.lt.s32.totalorder %v617, 10
    %vm620 = vcmp.lt.s32.totalorder %v618, 10
    %v621 = vsel %vm619, %v609, 0.0
    %v622 = vsel %vm620, %v610, 0.0
    %v623 = vld [vmem:[#allocation2] sm:$0x1]
    %vm624 = vcmask 7168
    %v625 = vsel %vm624, %v621, 0.0
    %v626 = vsel %vm624, %v622, 0.0
    %v627 = vadd.f32 %v625, %v626
    %628 = vadd.xlane.f32.xlu0 %v627
    %v629 = vpop.xlane.xlu0 %628
    %v630 = vrot.slane %v629, 4
    %v631 = vadd.f32 %v629, %v630
    %v632 = vrot.slane %v631, 2
    %v633 = vadd.f32 %v631, %v632
    %v634 = vrot.slane %v633, 1
    %v635 = vadd.f32 %v633, %v634
    %s636 = vtos %v635
    %v637 = vstv %s636
    %v638 = vadd.f32 %v623, %v637
    %639 = vst [vmem:[#allocation2] sm:$0x1] %v638
    // Predicated region
    $region58: #{tpu_custom_call.1} parent=1 // pred_check
      %p640 = pneg %p128
    $region59: #{tpu_custom_call.1} parent=1 // pred_check_branch
      %642 = sbr.rel (%p640) target = $region61
    $region60: #{tpu_custom_call.1} parent=1 // pred_region
      %v643 = vld [vmem:[#allocation2] sm:$0x1]
      %644 = vst [vmem:[#allocation11] sm:$0x1] %v643
    $region61: #{tpu_custom_call.1} parent=1 // pred_fallthru
      _
    // Predicated region
    $region62: #{tpu_custom_call.1} parent=1 // pred_check
      _
    $region63: #{tpu_custom_call.1} parent=1 // pred_check_branch
      %646 = sbr.rel (0) target = $region65
    $region64: #{tpu_custom_call.1} parent=1 // pred_region
      %s648 = ssub.s32 16, 16
      %649 = vsyncadd [#allocation5], %s648
      %s651 = sshll.u32 [#allocation11], 4
      %s652 = int_to_ptr.vmem [resolvable:$true] %s651
      %654 = dma.vmem_to_hbm [thread:$0]  %s652, 16, %s9, [#allocation5]
    $region65: #{tpu_custom_call.1} parent=1 // pred_fallthru
      _
    // Predicated region
    $region66: #{tpu_custom_call.1} parent=1 // pred_check
      _
    $region67: #{tpu_custom_call.1} parent=1 // pred_check_branch
      %656 = sbr.rel (0) target = $region69
    $region68: #{tpu_custom_call.1} parent=1 // pred_region
      %657 = dma.done [#allocation5], 16
    $region69: #{tpu_custom_call.1} parent=1 // pred_fallthru
      _
    %658 = vsyncpa [#allocation4], 1
    %659 = vsyncpa [#allocation7], 1
    %660 = vsyncpa [#allocation10], 1
    %661 = vsyncpa [#allocation5], 1

</llo_original>
